<compile_context>
chip_gen: v6e
topology: v6e:2x2x1
jax: 0.10.0
libtpu: 0.0.40
codegen_flags: <defaults>
</compile_context>

<pallas_src>
import functools

import jax
import jax.numpy as jnp
from jax.experimental import pallas as pl
from jax.experimental.pallas import tpu as pltpu

EPS = 1e-10       # DiceLoss default eps
NUM_STATS = 8     # [inter, sum_p, sum_t, bce@fg, bce_all, pad, pad, pad]
_MAX_ROW_TILE = 256


def _loss_stats_kernel(p_ref, t_ref, stats_ref):
    """Accumulate per-row (n*c) partial statistics over spatial tiles.

    p_ref, t_ref : (row_tile, spatial_tile) blocks of logits / binary targets
    stats_ref    : (row_tile, NUM_STATS) f32 accumulator, VMEM-resident across
                   the last ('arbitrary') spatial grid axis.
    """
    k = pl.program_id(2)

    @pl.when(k == 0)
    def _init():
        stats_ref[...] = jnp.zeros_like(stats_ref)

    x = p_ref[...].astype(jnp.float32)   # logits
    t = t_ref[...].astype(jnp.float32)   # binary {0,1} targets

    # One transcendental shared between sigmoid and the BCE softplus term.
    e = jnp.exp(-jnp.abs(x))
    r = pl.reciprocal(1.0 + e, approx=True)          # EUP slot, ~free
    s = jnp.where(x >= 0.0, r, e * r)                # sigmoid(x)
    # Numerically stable BCE-with-logits: max(x,0) - x*t + log(1 + exp(-|x|))
    bce = jnp.maximum(x, 0.0) - x * t + jnp.log1p(e)

    # Binary targets: t doubles as the foreground indicator, so no extra
    # compare / cast / (1 - t) masking is needed in the hot loop.
    stats_ref[:, 0:1] += jnp.sum(s * t, axis=-1, keepdims=True)    # intersection
    stats_ref[:, 1:2] += jnp.sum(s, axis=-1, keepdims=True)        # sum sigmoid
    stats_ref[:, 2:3] += jnp.sum(t, axis=-1, keepdims=True)        # sum targets (== #fg)
    stats_ref[:, 3:4] += jnp.sum(bce * t, axis=-1, keepdims=True)  # bce over fg
    stats_ref[:, 4:5] += jnp.sum(bce, axis=-1, keepdims=True)      # bce over all


@functools.lru_cache(maxsize=1)
def _vmem_config():
    """Generation-aware (input_block_budget_bytes, vmem_limit_bytes)."""
    cap = None
    try:
        info = pltpu.get_tpu_info()
        cap = int(getattr(info, "vmem_capacity_bytes", 0)) or None
    except Exception:
        cap = None
    if cap is None:
        cap = 64 * 1024 * 1024  # assume the smallest per-core VMEM (v7x)
    if cap >= 100 * 1024 * 1024:
        # v5e / v6e: 128 MiB physical VMEM -> big tiles, explicit scoped limit.
        return 32 * 1024 * 1024, 48 * 1024 * 1024
    # v7x: 64 MiB physical per TensorCore -- keep total well under it.
    return 24 * 1024 * 1024, 40 * 1024 * 1024


def _row_tile_candidates(nc):
    cands = [d for d in range(8, nc, 8) if nc % d == 0]  # multiples of 8 dividing nc
    cands.append(nc)                                     # full height is always legal
    return cands


def _pick_spatial_tile(hw, rt, in_bytes_per_elem, input_budget):
    """Largest multiple of 128 dividing hw whose double-buffered input blocks
    (both operands) fit the VMEM input budget."""
    if hw % 128 != 0:
        return hw
    n128 = hw // 128
    per_unit_bytes = 128 * 2 * rt * in_bytes_per_elem   # 2 pipeline buffers / input
    max_units = max(1, input_budget // per_unit_bytes)
    if max_units >= n128:
        return hw
    best, d = 1, 1
    while d * d <= n128:             # largest divisor of n128 that is <= max_units
        if n128 % d == 0:
            if d <= max_units:
                best = max(best, d)
            q = n128 // d
            if q <= max_units:
                best = max(best, q)
        d += 1
    return best * 128


def _choose_tiles(nc, hw, in_bytes_per_elem, input_budget):
    cands = _row_tile_candidates(nc)
    if hw % 128 == 0:
        capped = [d for d in cands if d <= _MAX_ROW_TILE] or [min(cands)]
        multi = [d for d in capped if d < nc]        # prefer >= 2 row blocks (v7x)
        rt = max(multi) if multi else max(capped)
        st = _pick_spatial_tile(hw, rt, in_bytes_per_elem, input_budget)
    else:
        # Spatial axis can't be tiled (block's last dim must equal the full
        # axis): shrink the row tile until the input blocks fit the budget.
        st = hw
        fitting = [d for d in cands if 2 * d * hw * in_bytes_per_elem <= input_budget]
        if fitting:
            multi = [d for d in fitting if d < nc]
            rt = max(multi) if multi else max(fitting)
        else:
            # TODO(synk): extremely large non-128-divisible spatial extents may
            # still exceed VMEM; a masked remainder tile would be needed there.
            rt = min(cands)
    return rt, st


@functools.partial(jax.jit, static_argnames=("spatial_tile", "row_tile"))
def dice_bce_loss(preds, targs, spatial_tile=None, row_tile=None):
    """DiceBCELoss(weighted_bce=True, normalize=True, generalized=False) forward.

    preds: (N, C, *spatial) logits, any float dtype (kept native; bf16 halves
           HBM traffic).
    targs: (N, C, *spatial) binary {0,1} targets, any dtype (uint8/bool/bf16
           recommended on HBM-bound chips; the kernel upcasts per tile).
    Returns a scalar float32 loss.
    """
    assert preds.ndim > 2, preds.shape
    assert preds.shape == targs.shape, (preds.shape, targs.shape)
    nc = preds.shape[0] * preds.shape[1]
    hw = 1
    for d in preds.shape[2:]:
        hw *= d
    n_elem = nc * hw

    # Native dtypes straight into the kernel (no wrapper-side HBM casts).
    p2 = preds.reshape(nc, hw)
    t2 = targs.reshape(nc, hw)
    in_bytes = p2.dtype.itemsize + t2.dtype.itemsize

    input_budget, vmem_limit = _vmem_config()
    auto_rt, auto_st = _choose_tiles(nc, hw, in_bytes, input_budget)
    rt = auto_rt if row_tile is None else row_tile
    st = auto_st if spatial_tile is None else spatial_tile
    assert nc % rt == 0 and (rt % 8 == 0 or rt == nc), (nc, rt)
    assert hw % st == 0 and (st % 128 == 0 or st == hw), (hw, st)

    n_row_blocks = nc // rt
    n_tiles = hw // st

    # v7x has two TensorCores: guarantee >= 2 parallel blocks by splitting the
    # spatial axis in two when a single row block covers all of N*C.
    parts = 2 if (n_row_blocks == 1 and n_tiles >= 2 and n_tiles % 2 == 0
                  and rt % 8 == 0) else 1
    tiles_per_part = n_tiles // parts

    stats = pl.pallas_call(
        _loss_stats_kernel,
        out_shape=jax.ShapeDtypeStruct((parts * nc, NUM_STATS), jnp.float32),
        grid_spec=pltpu.PrefetchScalarGridSpec(
            num_scalar_prefetch=0,
            grid=(parts, n_row_blocks, tiles_per_part),
            in_specs=[
                pl.BlockSpec((rt, st), lambda p, i, k: (i, p * tiles_per_part + k)),
                pl.BlockSpec((rt, st), lambda p, i, k: (i, p * tiles_per_part + k)),
            ],
            out_specs=pl.BlockSpec(
                (rt, NUM_STATS), lambda p, i, k: (p * n_row_blocks + i, 0)),
        ),
        compiler_params=pltpu.CompilerParams(
            dimension_semantics=("parallel", "parallel", "arbitrary"),
            vmem_limit_bytes=vmem_limit,
        ),
        cost_estimate=pl.CostEstimate(
            flops=int(14 * n_elem),
            transcendentals=int(3 * n_elem),
            bytes_accessed=int(
                p2.size * p2.dtype.itemsize
                + t2.size * t2.dtype.itemsize
                + parts * nc * NUM_STATS * 4
            ),
        ),
    )(p2, t2)

    # Combine the spatial halves (no-op when parts == 1).
    stats = stats.reshape(parts, nc, NUM_STATS).sum(axis=0)

    inter = stats[:, 0]
    sum_p = stats[:, 1]
    sum_t = stats[:, 2]
    bce_fg = jnp.sum(stats[:, 3])
    bce_all = jnp.sum(stats[:, 4])

    # Dice: per-(n,c) dice then mean (generalized=False).
    dice = 1.0 - (2.0 * inter + EPS) / (sum_p + sum_t + EPS)
    dice_loss = jnp.mean(dice)

    # Weighted BCE: weight = (#background / #foreground) where t == 1 else 1.
    # Binary targets => #fg == sum(t), #bg == numel - #fg, bce_bg = bce_all - bce_fg.
    numel = jnp.float32(n_elem)
    cnt_fg = jnp.sum(sum_t)
    cnt_bg = numel - cnt_fg
    bce_bg = bce_all - bce_fg
    # No foreground voxels -> the reference weight stays all ones (bce_fg == 0 then).
    ratio = jnp.where(cnt_fg > 0, cnt_bg / jnp.maximum(cnt_fg, 1.0), 0.0)
    bce_loss = (bce_bg + ratio * bce_fg) / numel

    return dice_loss + bce_loss


def _reference_loss(preds, targs):
    """Pure-JAX reference mirroring the PyTorch DiceBCELoss forward."""
    x = preds.astype(jnp.float32)
    t = targs.astype(jnp.float32)
    p = jax.nn.sigmoid(x)
    sum_dims = tuple(range(2, preds.ndim))
    inter = jnp.sum(p * t, axis=sum_dims)
    denom = jnp.sum(p, axis=sum_dims) + jnp.sum(t, axis=sum_dims)
    dice_loss = jnp.mean(1.0 - (2.0 * inter + EPS) / (denom + EPS))
    bce = jnp.maximum(x, 0.0) - x * t + jnp.log1p(jnp.exp(-jnp.abs(x)))
    ratio = jnp.sum(t == 0).astype(jnp.float32) / jnp.sum(t == 1).astype(jnp.float32)
    w = jnp.where(t == 1, ratio, 1.0)
    return dice_loss + jnp.mean(w * bce)


if __name__ == "__main__":
    key = jax.random.PRNGKey(0)
    k1, k2 = jax.random.split(key)

    # Small NCHW inputs: batch=2, channels=4, spatial 16x16.
    # bf16 logits + f32 binary targets flow through in their native dtypes.
    preds = jax.random.normal(k1, (2, 4, 16, 16), dtype=jnp.bfloat16)
    targs = jax.random.bernoulli(k2, p=0.3, shape=(2, 4, 16, 16)).astype(jnp.float32)

    loss = dice_bce_loss(preds, targs)
    jax.block_until_ready(loss)

    # Also exercise the multi-tile / spatial-split (megacore) path.
    loss_tiled = dice_bce_loss(preds, targs, spatial_tile=128)
    jax.block_until_ready(loss_tiled)

    ref = _reference_loss(preds, targs)
    assert loss.shape == () and bool(jnp.isfinite(loss)), loss
    assert bool(jnp.allclose(loss, ref, rtol=5e-2, atol=1e-3)), (loss, ref)
    assert bool(jnp.allclose(loss_tiled, ref, rtol=5e-2, atol=1e-3)), (loss_tiled, ref)
    print("KERNEL_OK")
</pallas_src>

<mosaic_0001>
module attributes {stable_mosaic.version = 11 : i64} {
  func.func @_loss_stats_kernel(%arg0: i32, %arg1: i32, %arg2: i32, %arg3: memref<8x256xbf16, #tpu.memory_space<vmem>>, %arg4: memref<8x256xf32, #tpu.memory_space<vmem>>, %arg5: memref<8x8xf32, #tpu.memory_space<vmem>>) attributes {dimension_semantics = [#tpu.dimension_semantics<parallel>, #tpu.dimension_semantics<parallel>, #tpu.dimension_semantics<arbitrary>], iteration_bounds = array<i64: 1, 1, 1>, scalar_prefetch = 0 : i64, scratch_operands = 0 : i64, tpu.core_type = #tpu.core_type<tc>, window_params = [{transform_indices = @transform_0, window_bounds = array<i64: 8, 256>}, {transform_indices = @transform_1, window_bounds = array<i64: 8, 256>}, {transform_indices = @transform_2, window_bounds = array<i64: 8, 8>}]} {
    %c0_i32 = arith.constant 0 : i32
    %0 = arith.cmpi eq, %arg2, %c0_i32 : i32
    %1 = arith.extui %0 : i1 to i32
    %c0_i32_0 = arith.constant 0 : i32
    %2 = arith.cmpi ne, %1, %c0_i32_0 : i32
    scf.if %2 {
      %cst_28 = arith.constant 0.000000e+00 : f32
      %50 = vector.broadcast %cst_28 : f32 to vector<8x8xf32>
      %c0_29 = arith.constant 0 : index
      %c0_30 = arith.constant 0 : index
      %51 = vector.load %arg5[%c0_29, %c0_30] : memref<8x8xf32, #tpu.memory_space<vmem>>, vector<8x8xf32>
      tpu.vector_store %arg5[%c0_29, %c0_30], %50 {strides = array<i32>} : memref<8x8xf32, #tpu.memory_space<vmem>>, vector<8x8xf32>,
    } else {
    }
    %c0 = arith.constant 0 : index
    %c0_1 = arith.constant 0 : index
    %3 = vector.load %arg3[%c0, %c0_1] : memref<8x256xbf16, #tpu.memory_space<vmem>>, vector<8x256xbf16>
    %4 = arith.extf %3 : vector<8x256xbf16> to vector<8x256xf32>
    %c0_2 = arith.constant 0 : index
    %c0_3 = arith.constant 0 : index
    %5 = vector.load %arg4[%c0_2, %c0_3] : memref<8x256xf32, #tpu.memory_space<vmem>>, vector<8x256xf32>
    %6 = math.absf %4 : vector<8x256xf32>
    %cst = arith.constant 0.000000e+00 : f32
    %7 = vector.broadcast %cst : f32 to vector<8x256xf32>
    %8 = arith.subf %7, %6 : vector<8x256xf32>
    %9 = math.exp %8 : vector<8x256xf32>
    %cst_4 = arith.constant 1.000000e+00 : f32
    %10 = vector.broadcast %cst_4 : f32 to vector<8x256xf32>
    %11 = arith.addf %10, %9 : vector<8x256xf32>
    %12 = tpu.reciprocal %11 {approx = true} : vector<8x256xf32> -> vector<8x256xf32>
    %cst_5 = arith.constant 0.000000e+00 : f32
    %13 = vector.broadcast %cst_5 : f32 to vector<8x256xf32>
    %14 = arith.cmpf oge, %4, %13 : vector<8x256xf32>
    %15 = arith.mulf %9, %12 : vector<8x256xf32>
    %16 = arith.select %14, %12, %15 : vector<8x256xi1>, vector<8x256xf32>
    %cst_6 = arith.constant 0.000000e+00 : f32
    %17 = vector.broadcast %cst_6 : f32 to vector<8x256xf32>
    %18 = arith.maximumf %4, %17 : vector<8x256xf32>
    %19 = arith.mulf %4, %5 : vector<8x256xf32>
    %20 = arith.subf %18, %19 : vector<8x256xf32>
    %21 = math.log1p %9 : vector<8x256xf32>
    %22 = arith.addf %20, %21 : vector<8x256xf32>
    %c0_7 = arith.constant 0 : index
    %c0_8 = arith.constant 0 : index
    %23 = vector.load %arg5[%c0_7, %c0_8] : memref<8x8xf32, #tpu.memory_space<vmem>>, vector<8x1xf32>
    %24 = arith.mulf %16, %5 : vector<8x256xf32>
    %cst_9 = arith.constant dense<0.000000e+00> : vector<8xf32>
    %25 = vector.multi_reduction <add>, %24, %cst_9 [1] : vector<8x256xf32> to vector<8xf32>
    %26 = vector.shape_cast %25 : vector<8xf32> to vector<8x1xf32>
    %27 = arith.addf %23, %26 : vector<8x1xf32>
    %c0_10 = arith.constant 0 : index
    %c0_11 = arith.constant 0 : index
    %28 = vector.load %arg5[%c0_10, %c0_11] : memref<8x8xf32, #tpu.memory_space<vmem>>, vector<8x1xf32>
    tpu.vector_store %arg5[%c0_10, %c0_11], %27 {strides = array<i32>} : memref<8x8xf32, #tpu.memory_space<vmem>>, vector<8x1xf32>,
    %c0_12 = arith.constant 0 : index
    %c1 = arith.constant 1 : index
    %29 = vector.load %arg5[%c0_12, %c1] : memref<8x8xf32, #tpu.memory_space<vmem>>, vector<8x1xf32>
    %cst_13 = arith.constant dense<0.000000e+00> : vector<8xf32>
    %30 = vector.multi_reduction <add>, %16, %cst_13 [1] : vector<8x256xf32> to vector<8xf32>
    %31 = vector.shape_cast %30 : vector<8xf32> to vector<8x1xf32>
    %32 = arith.addf %29, %31 : vector<8x1xf32>
    %c0_14 = arith.constant 0 : index
    %c1_15 = arith.constant 1 : index
    %33 = vector.load %arg5[%c0_14, %c1_15] : memref<8x8xf32, #tpu.memory_space<vmem>>, vector<8x1xf32>
    tpu.vector_store %arg5[%c0_14, %c1_15], %32 {strides = array<i32>} : memref<8x8xf32, #tpu.memory_space<vmem>>, vector<8x1xf32>,
    %c0_16 = arith.constant 0 : index
    %c2 = arith.constant 2 : index
    %34 = vector.load %arg5[%c0_16, %c2] : memref<8x8xf32, #tpu.memory_space<vmem>>, vector<8x1xf32>
    %cst_17 = arith.constant dense<0.000000e+00> : vector<8xf32>
    %35 = vector.multi_reduction <add>, %5, %cst_17 [1] : vector<8x256xf32> to vector<8xf32>
    %36 = vector.shape_cast %35 : vector<8xf32> to vector<8x1xf32>
    %37 = arith.addf %34, %36 : vector<8x1xf32>
    %c0_18 = arith.constant 0 : index
    %c2_19 = arith.constant 2 : index
    %38 = vector.load %arg5[%c0_18, %c2_19] : memref<8x8xf32, #tpu.memory_space<vmem>>, vector<8x1xf32>
    tpu.vector_store %arg5[%c0_18, %c2_19], %37 {strides = array<i32>} : memref<8x8xf32, #tpu.memory_space<vmem>>, vector<8x1xf32>,
    %c0_20 = arith.constant 0 : index
    %c3 = arith.constant 3 : index
    %39 = vector.load %arg5[%c0_20, %c3] : memref<8x8xf32, #tpu.memory_space<vmem>>, vector<8x1xf32>
    %40 = arith.mulf %22, %5 : vector<8x256xf32>
    %cst_21 = arith.constant dense<0.000000e+00> : vector<8xf32>
    %41 = vector.multi_reduction <add>, %40, %cst_21 [1] : vector<8x256xf32> to vector<8xf32>
    %42 = vector.shape_cast %41 : vector<8xf32> to vector<8x1xf32>
    %43 = arith.addf %39, %42 : vector<8x1xf32>
    %c0_22 = arith.constant 0 : index
    %c3_23 = arith.constant 3 : index
    %44 = vector.load %arg5[%c0_22, %c3_23] : memref<8x8xf32, #tpu.memory_space<vmem>>, vector<8x1xf32>
    tpu.vector_store %arg5[%c0_22, %c3_23], %43 {strides = array<i32>} : memref<8x8xf32, #tpu.memory_space<vmem>>, vector<8x1xf32>,
    %c0_24 = arith.constant 0 : index
    %c4 = arith.constant 4 : index
    %45 = vector.load %arg5[%c0_24, %c4] : memref<8x8xf32, #tpu.memory_space<vmem>>, vector<8x1xf32>
    %cst_25 = arith.constant dense<0.000000e+00> : vector<8xf32>
    %46 = vector.multi_reduction <add>, %22, %cst_25 [1] : vector<8x256xf32> to vector<8xf32>
    %47 = vector.shape_cast %46 : vector<8xf32> to vector<8x1xf32>
    %48 = arith.addf %45, %47 : vector<8x1xf32>
    %c0_26 = arith.constant 0 : index
    %c4_27 = arith.constant 4 : index
    %49 = vector.load %arg5[%c0_26, %c4_27] : memref<8x8xf32, #tpu.memory_space<vmem>>, vector<8x1xf32>
    tpu.vector_store %arg5[%c0_26, %c4_27], %48 {strides = array<i32>} : memref<8x8xf32, #tpu.memory_space<vmem>>, vector<8x1xf32>,
    return
  }
  func.func @transform_0(%arg0: i32, %arg1: i32, %arg2: i32) -> (i32, i32) {
    %c1_i32 = arith.constant 1 : i32
    %0 = arith.muli %arg0, %c1_i32 : i32
    %1 = arith.addi %0, %arg2 : i32
    %c0_i32 = arith.constant 0 : i32
    return %arg1, %1 : i32, i32
  }
  func.func @transform_1(%arg0: i32, %arg1: i32, %arg2: i32) -> (i32, i32) {
    %c1_i32 = arith.constant 1 : i32
    %0 = arith.muli %arg0, %c1_i32 : i32
    %1 = arith.addi %0, %arg2 : i32
    %c0_i32 = arith.constant 0 : i32
    return %arg1, %1 : i32, i32
  }
  func.func @transform_2(%arg0: i32, %arg1: i32, %arg2: i32) -> (i32, i32) {
    %c1_i32 = arith.constant 1 : i32
    %0 = arith.muli %arg0, %c1_i32 : i32
    %1 = arith.addi %0, %arg1 : i32
    %c0_i32 = arith.constant 0 : i32
    %c0_i32_0 = arith.constant 0 : i32
    return %1, %c0_i32 : i32, i32
  }
}

</mosaic_0001>

<llo_original>
// kernel: dice_bce_loss.1
$region0: #{dice_bce_loss.1}
  #allocation0 [shape = 'u32[]', space=smem, size = 0x4, offset = 0x4, fixed_abs, tag = 'smem constant byte address 0x4 - core index']
  #allocation1 [shape = 'u32[144,128]{1,0:T(1,128)}', space=vmem, size = 0x12000, scoped, tag = 'internal scratch']
  %s0 = inlined_call_operand.vmem [shape: bf16[8,256], index: 0, kind: input, shape index: {}]
  %s1 = inlined_call_operand.vmem [shape: f32[8,256], index: 1, kind: input, shape index: {}]
  %s2 = inlined_call_operand.vmem [shape: f32[8,8], index: 2, kind: output, shape index: {}]
  %s3 = sld [smem:[#allocation0]]
  $region22: #{dice_bce_loss.1} parent=0
    _
  %s5 = ssub.s32 1, %s3
  %s6 = scalar_select 0, %s5, %s3
  // Predicated region
  $region2: #{dice_bce_loss.1} parent=0 // pred_check
    _
  $region3: #{dice_bce_loss.1} parent=0 // pred_check_branch
    %8 = sbr.rel (0) target = $region5
  $region4: #{dice_bce_loss.1} parent=0 // pred_region
    %s9 = sadd.s32 0, 0
    %s10 = smul.u32 2, %s9
    %p11 = scmp.lt.s32.totalorder %s10, 1
    %s12 = scalar_select %p11, %s10, 1
    %s13 = smul.addr %s12, 4
    %s14 = scalar_lea.vmem %s0, %s13
    %s15 = sadd.s32 0, 0
    %s16 = smul.u32 2, %s15
  $region5: #{dice_bce_loss.1} parent=0 // pred_fallthru
    _
  // Predicated region
  $region6: #{dice_bce_loss.1} parent=0 // pred_check
    _
  $region7: #{dice_bce_loss.1} parent=0 // pred_check_branch
    %18 = sbr.rel (0) target = $region9
  $region8: #{dice_bce_loss.1} parent=0 // pred_region
    %s19 = sadd.s32 0, 0
    %s20 = smul.u32 2, %s19
    %p21 = scmp.lt.s32.totalorder %s20, 1
    %s22 = scalar_select %p21, %s20, 1
    %s23 = smul.addr %s22, 8
    %s24 = scalar_lea.vmem %s1, %s23
    %s25 = sadd.s32 0, 0
    %s26 = smul.u32 2, %s25
  $region9: #{dice_bce_loss.1} parent=0 // pred_fallthru
    _
  %s27 = sadd.s32 0, 0
  %s28 = smul.u32 2, %s27
  %p29 = scmp.lt.s32.totalorder %s28, 1
  %s30 = scalar_select %p29, %s28, 1
  %s31 = smul.addr %s30, 4
  %s32 = scalar_lea.vmem %s0, %s31
  %s33 = sadd.s32 0, 0
  %s34 = smul.u32 2, %s33
  %p35 = scmp.lt.s32.totalorder %s34, 1
  %s36 = scalar_select %p35, %s34, 1
  %s37 = smul.addr %s36, 8
  %s38 = scalar_lea.vmem %s1, %s37
  %s39 = sadd.s32 0, 0
  %p40 = scmp.lt.s32.totalorder %s39, 0
  %s41 = scalar_select %p40, %s39, 0
  %s42 = smul.addr %s41, 8
  %s43 = scalar_lea.vmem %s2, %s42
  %s44 = sadd.s32 0, 0
  %s45 = smul.u32 2, %s44
  %p46 = scmp.lt.s32.totalorder %s45, 1
  %s47 = scalar_select %p46, %s45, 1
  %s48 = smul.addr %s47, 4
  %s49 = scalar_lea.vmem %s0, %s48
  %s50 = sadd.s32 0, 0
  %s51 = smul.u32 2, %s50
  %s52 = sadd.s32 0, 0
  %s53 = smul.u32 2, %s52
  %p54 = scmp.lt.s32.totalorder %s53, 1
  %s55 = scalar_select %p54, %s53, 1
  %s56 = smul.addr %s55, 8
  %s57 = scalar_lea.vmem %s1, %s56
  %s58 = sadd.s32 0, 0
  %s59 = smul.u32 2, %s58
  %s60 = sadd.s32 0, 0
  %p61 = scmp.lt.s32.totalorder %s60, 0
  %s62 = scalar_select %p61, %s60, 0
  %s63 = smul.addr %s62, 8
  %s64 = scalar_lea.vmem %s2, %s63
  %s65 = sadd.s32 0, 0
  %p66 = scmp.eq.s32.totalorder 0, 0
  // Predicated region
  $region10: #{dice_bce_loss.1} parent=0 // pred_check
    %p67 = pneg %p66
  $region11: #{dice_bce_loss.1} parent=0 // pred_check_branch
    %69 = sbr.rel (%p67) target = $region13
  $region12: #{dice_bce_loss.1} parent=0 // pred_region
    %vm70 = vcmask 64512
    %71 = vst.msk [vmem:[%s64] sm:$0xff] %vm70, 0.0
  $region13: #{dice_bce_loss.1} parent=0 // pred_fallthru
    _
  %v72 = vld [vmem:[%s49] sm:$0xff]
  %v73 = vunpack.c.l.bf16 %v72
  %v74 = vunpack.c.h.bf16 %v72
  %v75 = vld [vmem:[%s57] sm:$0xff]
  %v76 = vld [vmem:[%s57 + $0x8] sm:$0xff]
  %v77 = vand.u32 2147483647, %v73
  %v78 = vand.u32 2147483647, %v74
  %v79 = vsub.f32 0.0, %v77
  %v80 = vsub.f32 0.0, %v78
  %v81 = vmul.f32 %v79, 1.442695
  %v82 = vpow.pop %v81
  %v83 = vmul.f32 %v80, 1.442695
  %v84 = vpow.pop %v83
  %v85 = vadd.f32 %v82, 1.0
  %v86 = vadd.f32 %v84, 1.0
  %v87 = vrcp.pop %v85
  %v88 = vrcp.pop %v86
  %vm89 = vcmp.ge.f32.partialorder %v73, 0.0
  %vm90 = vcmp.ge.f32.partialorder %v74, 0.0
  %v91 = vmul.f32 %v82, %v87
  %v92 = vmul.f32 %v84, %v88
  %v93 = vsel %vm89, %v87, %v91
  %v94 = vsel %vm90, %v88, %v92
  %v95 = vmax.f32 %v73, 0.0
  %v96 = vmax.f32 %v74, 0.0
  %v97 = vmul.f32 %v73, %v75
  %v98 = vmul.f32 %v74, %v76
  %v99 = vsub.f32 %v95, %v97
  %v100 = vsub.f32 %v96, %v98
  %v101 = vadd.f32 %v82, 1.0
  %v102 = vlog2.pop %v101
  %v103 = vmul.f32 %v102, 0.6931472
  %v104 = vmul.f32 -0.5, %v82
  %v105 = vadd.f32 %v104, 1.0
  %v106 = vmul.f32 %v105, %v82
  %v107 = vand.u32 2147483647, %v82
  %vm108 = vcmp.lt.f32.partialorder %v107, 0.0004427343
  %v109 = vsel %vm108, %v106, %v103
  %v110 = vadd.f32 %v84, 1.0
  %v111 = vlog2.pop %v110
  %v112 = vmul.f32 %v111, 0.6931472
  %v113 = vmul.f32 -0.5, %v84
  %v114 = vadd.f32 %v113, 1.0
  %v115 = vmul.f32 %v114, %v84
  %v116 = vand.u32 2147483647, %v84
  %vm117 = vcmp.lt.f32.partialorder %v116, 0.0004427343
  %v118 = vsel %vm117, %v115, %v112
  %v119 = vadd.f32 %v99, %v109
  %v120 = vadd.f32 %v100, %v118
  %v121 = vld [vmem:[%s64] sm:$0xff]
  %v122 = vmul.f32 %v93, %v75
  %v123 = vmul.f32 %v94, %v76
  %v124 = vadd.f32 %v122, %v123
  %125 = vadd.xlane.f32.xlu0 %v124
  %v126 = vpop.xlane.xlu0 %125
  %v127 = vadd.f32 %v121, %v126
  %vm128 = vcmask 7168
  %129 = vst.msk [vmem:[%s64] sm:$0xff] %vm128, %v127
  %v130 = vld [vmem:[%s64] sm:$0xff]
  %v131 = vadd.f32 %v93, %v94
  %132 = vadd.xlane.f32.xlu0 %v131
  %v133 = vpop.xlane.xlu0 %132
  %v134 = vadd.f32 %v130, %v133
  %vm135 = vcmask 15368
  %136 = vst.msk [vmem:[%s64] sm:$0xff] %vm135, %v134
  %v137 = vld [vmem:[%s64] sm:$0xff]
  %v138 = vadd.f32 %v75, %v76
  %139 = vadd.xlane.f32.xlu0 %v138
  %v140 = vpop.xlane.xlu0 %139
  %v141 = vadd.f32 %v137, %v140
  %vm142 = vcmask 23568
  %143 = vst.msk [vmem:[%s64] sm:$0xff] %vm142, %v141
  %v144 = vld [vmem:[%s64] sm:$0xff]
  %v145 = vmul.f32 %v119, %v75
  %v146 = vmul.f32 %v120, %v76
  %v147 = vadd.f32 %v145, %v146
  %148 = vadd.xlane.f32.xlu0 %v147
  %v149 = vpop.xlane.xlu0 %148
  %v150 = vadd.f32 %v144, %v149
  %vm151 = vcmask 31768
  %152 = vst.msk [vmem:[%s64] sm:$0xff] %vm151, %v150
  %v153 = vld [vmem:[%s64] sm:$0xff]
  %v154 = vadd.f32 %v119, %v120
  %155 = vadd.xlane.f32.xlu0 %v154
  %v156 = vpop.xlane.xlu0 %155
  %v157 = vadd.f32 %v153, %v156
  %vm158 = vcmask 39968
  %159 = vst.msk [vmem:[%s64] sm:$0xff] %vm158, %v157
  %s160 = sadd.s32 0, 0
  %p161 = scmp.lt.s32.totalorder %s160, 0
  %s162 = scalar_select %p161, %s160, 0
  %s163 = smul.addr %s162, 8
  %s164 = scalar_lea.vmem %s2, %s163
  // Predicated region
  $region14: #{dice_bce_loss.1} parent=0 // pred_check
    _
  $region15: #{dice_bce_loss.1} parent=0 // pred_check_branch
    %166 = sbr.rel (0) target = $region17
  $region16: #{dice_bce_loss.1} parent=0 // pred_region
    %s167 = sadd.s32 0, 0
  $region17: #{dice_bce_loss.1} parent=0 // pred_fallthru
    _
  // Predicated region
  $region18: #{dice_bce_loss.1} parent=0 // pred_check
    _
  $region19: #{dice_bce_loss.1} parent=0 // pred_check_branch
    %169 = sbr.rel (0) target = $region21
  $region20: #{dice_bce_loss.1} parent=0 // pred_region
    %s170 = sadd.s32 0, 0
    %p171 = scmp.lt.s32.totalorder %s170, 0
    %s172 = scalar_select %p171, %s170, 0
    %s173 = smul.addr %s172, 8
    %s174 = scalar_lea.vmem %s2, %s173
  $region21: #{dice_bce_loss.1} parent=0 // pred_fallthru
    _

</llo_original>
